<compile_context>
chip_gen: v7x
topology: tpu7x:2x2x1
jax: 0.10.0
libtpu: 0.0.40
codegen_flags: <defaults>
</compile_context>

<pallas_src>
import jax
import jax.numpy as jnp
from jax.experimental import pallas as pl
from jax.experimental.pallas import tpu as pltpu


def _round_up(n, m):
    return ((n + m - 1) // m) * m


def _critic_mlp_kernel(xt_ref, w1t_ref, b1_ref, w2_ref, b2_ref, o_ref):
    # xt_ref : [n_in, TB]    (batch on lanes)
    # w1t_ref: [n_hid, n_in] (= w1.T, VMEM-resident across grid steps)
    # b1_ref : [n_hid, 1]    (column -> broadcasts along lanes)
    # w2_ref : [n_hid, n_out]
    # b2_ref : [n_out, 1]
    # o_ref  : [n_out, TB]   (lane-dense output row)
    h = jnp.dot(w1t_ref[...], xt_ref[...],
                preferred_element_type=jnp.float32)          # [n_hid, TB] on the MXU
    h = jnp.maximum(h + b1_ref[...], 0.0)                    # bias add + ReLU on the VPU

    n_out = o_ref.shape[0]
    if n_out == 1:
        # N=1 second layer: VPU multiply + sublane reduce -> avoids a wasteful dependent
        # MXU push/pop for <0.1% MXU utilization.
        y = jnp.sum(h * w2_ref[...], axis=0, keepdims=True)  # [1, TB]
    else:
        # General path: (w2^T) @ h via dot_general contracting the n_hid axes.
        y = jax.lax.dot_general(
            w2_ref[...], h,
            dimension_numbers=(((0,), (0,)), ((), ())),
            preferred_element_type=jnp.float32)               # [n_out, TB]

    o_ref[...] = (y + b2_ref[...]).astype(o_ref.dtype)


def critic_forward(x, w1, b1, w2, b2, *, block_rows=1024):
    """Forward pass of Critic_NN: relu(x @ w1 + b1) @ w2 + b2.

    x : [B, n_in] (or [n_in] for a single state)  float32
    w1: [n_in, n_hid]   b1: [n_hid]
    w2: [n_hid, n_out]  b2: [n_out]
    Returns [B, n_out] float32 (or [n_out] if x was 1-D).
    """
    x = jnp.asarray(x, jnp.float32)
    squeeze = False
    if x.ndim == 1:
        x = x[None, :]
        squeeze = True

    B, n_in = x.shape
    n_hid = w1.shape[1]
    n_out = w2.shape[1]

    # Lane-dense batch tiling: tile size is a multiple of 128 lanes.
    tb = _round_up(min(block_rows, B), 128)
    b_pad = _round_up(B, tb)
    num_blocks = b_pad // tb

    # Layout plumbing in the wrapper (cheap XLA ops on tiny arrays):
    # batch rows go onto the lane axis; biases become lane-broadcastable columns.
    xt = jnp.pad(x.T, ((0, 0), (0, b_pad - B)))               # [n_in, B_pad]
    w1t = w1.T                                                # [n_hid, n_in]
    b1c = jnp.reshape(b1, (n_hid, 1)).astype(jnp.float32)     # [n_hid, 1]
    b2c = jnp.reshape(b2, (n_out, 1)).astype(jnp.float32)     # [n_out, 1]
    w2f = jnp.asarray(w2, jnp.float32)

    flops = 2 * B * (n_in * n_hid + n_hid * n_out)
    bytes_accessed = 4 * (xt.size + w1t.size + b1c.size + w2f.size + b2c.size
                          + n_out * b_pad)

    out_t = pl.pallas_call(
        _critic_mlp_kernel,
        out_shape=jax.ShapeDtypeStruct((n_out, b_pad), jnp.float32),
        grid=(num_blocks,),
        in_specs=[
            pl.BlockSpec((n_in, tb), lambda i: (0, i)),        # x tile (pipelined)
            pl.BlockSpec((n_hid, n_in), lambda i: (0, 0)),     # w1^T, resident
            pl.BlockSpec((n_hid, 1), lambda i: (0, 0)),        # b1 column, resident
            pl.BlockSpec((n_hid, n_out), lambda i: (0, 0)),    # w2, resident
            pl.BlockSpec((n_out, 1), lambda i: (0, 0)),        # b2 column, resident
        ],
        out_specs=pl.BlockSpec((n_out, tb), lambda i: (0, i)), # lane-dense output tile
        compiler_params=pltpu.CompilerParams(
            dimension_semantics=("parallel",),                 # shards over v7x's 2 TCs
        ),
        cost_estimate=pl.CostEstimate(
            flops=flops, transcendentals=0, bytes_accessed=bytes_accessed),
    )(xt, w1t, b1c, w2f, b2c)

    out = out_t[:, :B].T                                       # [B, n_out]
    return out[0] if squeeze else out


def init_params(key, n_inputs=4, n_hiddens=20, n_outputs=1):
    """Deterministic init mimicking PyTorch nn.Linear default U[-1/sqrt(fan_in), 1/sqrt(fan_in)]."""
    k1, k2, k3, k4 = jax.random.split(key, 4)
    bound1 = 1.0 / jnp.sqrt(n_inputs)
    bound2 = 1.0 / jnp.sqrt(n_hiddens)
    w1 = jax.random.uniform(k1, (n_inputs, n_hiddens), jnp.float32, -bound1, bound1)
    b1 = jax.random.uniform(k2, (n_hiddens,), jnp.float32, -bound1, bound1)
    w2 = jax.random.uniform(k3, (n_hiddens, n_outputs), jnp.float32, -bound2, bound2)
    b2 = jax.random.uniform(k4, (n_outputs,), jnp.float32, -bound2, bound2)
    return w1, b1, w2, b2


if __name__ == "__main__":
    key = jax.random.PRNGKey(0)
    k_params, k_x1, k_x2 = jax.random.split(key, 3)

    n_inputs, n_hiddens, n_outputs = 4, 20, 1
    w1, b1, w2, b2 = init_params(k_params, n_inputs, n_hiddens, n_outputs)

    # Small per-step shape (matches the PyTorch module's typical call).
    x_small = jax.random.normal(k_x1, (8, n_inputs), jnp.float32)
    out_small = jax.block_until_ready(critic_forward(x_small, w1, b1, w2, b2))
    ref_small = jnp.maximum(x_small @ w1 + b1, 0.0) @ w2 + b2
    assert out_small.shape == (8, n_outputs)
    assert jnp.allclose(out_small, ref_small, atol=1e-4, rtol=1e-4)

    # Batched-rollout shape exercising multiple grid blocks + ragged-batch padding.
    x_big = jax.random.normal(k_x2, (1000, n_inputs), jnp.float32)
    out_big = jax.block_until_ready(
        critic_forward(x_big, w1, b1, w2, b2, block_rows=256))
    ref_big = jnp.maximum(x_big @ w1 + b1, 0.0) @ w2 + b2
    assert out_big.shape == (1000, n_outputs)
    assert jnp.allclose(out_big, ref_big, atol=1e-4, rtol=1e-4)

    # TODO(synk): advantage()/update() (TD error, Adam step, autograd backward) are
    # training-loop concerns, not forward-pass kernel work.
    print("KERNEL_OK")
</pallas_src>

<mosaic_0001>
module attributes {stable_mosaic.version = 11 : i64} {
  func.func @_critic_mlp_kernel(%arg0: i32, %arg1: memref<4x128xf32, #tpu.memory_space<vmem>>, %arg2: memref<20x4xf32, #tpu.memory_space<vmem>>, %arg3: memref<20x1xf32, #tpu.memory_space<vmem>>, %arg4: memref<20x1xf32, #tpu.memory_space<vmem>>, %arg5: memref<1x1xf32, #tpu.memory_space<vmem>>, %arg6: memref<1x128xf32, #tpu.memory_space<vmem>>) attributes {dimension_semantics = [#tpu.dimension_semantics<parallel>], iteration_bounds = array<i64: 1>, scalar_prefetch = 0 : i64, scratch_operands = 0 : i64, tpu.core_type = #tpu.core_type<tc>, window_params = [{transform_indices = @transform_0, window_bounds = array<i64: 4, 128>}, {pipeline_mode = #tpu.pipeline_mode<synchronous>, transform_indices = @transform_1, window_bounds = array<i64: 20, 4>}, {pipeline_mode = #tpu.pipeline_mode<synchronous>, transform_indices = @transform_2, window_bounds = array<i64: 20, 1>}, {pipeline_mode = #tpu.pipeline_mode<synchronous>, transform_indices = @transform_3, window_bounds = array<i64: 20, 1>}, {pipeline_mode = #tpu.pipeline_mode<synchronous>, transform_indices = @transform_4, window_bounds = array<i64: 1, 1>}, {transform_indices = @transform_5, window_bounds = array<i64: 1, 128>}]} {
    %c0 = arith.constant 0 : index
    %c0_0 = arith.constant 0 : index
    %0 = vector.load %arg2[%c0, %c0_0] : memref<20x4xf32, #tpu.memory_space<vmem>>, vector<20x4xf32>
    %c0_1 = arith.constant 0 : index
    %c0_2 = arith.constant 0 : index
    %1 = vector.load %arg1[%c0_1, %c0_2] : memref<4x128xf32, #tpu.memory_space<vmem>>, vector<4x128xf32>
    %cst = arith.constant dense<0.000000e+00> : vector<20x128xf32>
    %2 = tpu.matmul %0, %1, %cst {dimension_numbers = #tpu.dot_dimension_numbers<[1], [0], [0], [1], [0, 0, 1, 1], [], []>} : vector<20x4xf32>, vector<4x128xf32>, vector<20x128xf32> -> vector<20x128xf32>
    %c0_3 = arith.constant 0 : index
    %c0_4 = arith.constant 0 : index
    %3 = vector.load %arg3[%c0_3, %c0_4] : memref<20x1xf32, #tpu.memory_space<vmem>>, vector<20x1xf32>
    %4 = vector.broadcast %3 : vector<20x1xf32> to vector<20x128xf32>
    %5 = arith.addf %2, %4 : vector<20x128xf32>
    %cst_5 = arith.constant 0.000000e+00 : f32
    %6 = vector.broadcast %cst_5 : f32 to vector<20x128xf32>
    %7 = arith.maximumf %5, %6 : vector<20x128xf32>
    %c0_6 = arith.constant 0 : index
    %c0_7 = arith.constant 0 : index
    %8 = vector.load %arg4[%c0_6, %c0_7] : memref<20x1xf32, #tpu.memory_space<vmem>>, vector<20x1xf32>
    %9 = vector.broadcast %8 : vector<20x1xf32> to vector<20x128xf32>
    %10 = arith.mulf %7, %9 : vector<20x128xf32>
    %cst_8 = arith.constant dense<0.000000e+00> : vector<128xf32>
    %11 = vector.multi_reduction <add>, %10, %cst_8 [0] : vector<20x128xf32> to vector<128xf32>
    %12 = vector.shape_cast %11 : vector<128xf32> to vector<1x128xf32>
    %c0_9 = arith.constant 0 : index
    %c0_10 = arith.constant 0 : index
    %13 = vector.load %arg5[%c0_9, %c0_10] : memref<1x1xf32, #tpu.memory_space<vmem>>, vector<1x1xf32>
    %14 = vector.broadcast %13 : vector<1x1xf32> to vector<1x128xf32>
    %15 = arith.addf %12, %14 : vector<1x128xf32>
    %c0_11 = arith.constant 0 : index
    %c0_12 = arith.constant 0 : index
    %16 = vector.load %arg6[%c0_11, %c0_12] : memref<1x128xf32, #tpu.memory_space<vmem>>, vector<1x128xf32>
    tpu.vector_store %arg6[%c0_11, %c0_12], %15 {strides = array<i32>} : memref<1x128xf32, #tpu.memory_space<vmem>>, vector<1x128xf32>,
    return
  }
  func.func @transform_0(%arg0: i32) -> (i32, i32) {
    %c0_i32 = arith.constant 0 : i32
    %c0_i32_0 = arith.constant 0 : i32
    return %c0_i32, %arg0 : i32, i32
  }
  func.func @transform_1(%arg0: i32) -> (i32, i32) {
    %c0_i32 = arith.constant 0 : i32
    %c0_i32_0 = arith.constant 0 : i32
    %c0_i32_1 = arith.constant 0 : i32
    return %c0_i32, %c0_i32_0 : i32, i32
  }
  func.func @transform_2(%arg0: i32) -> (i32, i32) {
    %c0_i32 = arith.constant 0 : i32
    %c0_i32_0 = arith.constant 0 : i32
    %c0_i32_1 = arith.constant 0 : i32
    return %c0_i32, %c0_i32_0 : i32, i32
  }
  func.func @transform_3(%arg0: i32) -> (i32, i32) {
    %c0_i32 = arith.constant 0 : i32
    %c0_i32_0 = arith.constant 0 : i32
    %c0_i32_1 = arith.constant 0 : i32
    return %c0_i32, %c0_i32_0 : i32, i32
  }
  func.func @transform_4(%arg0: i32) -> (i32, i32) {
    %c0_i32 = arith.constant 0 : i32
    %c0_i32_0 = arith.constant 0 : i32
    %c0_i32_1 = arith.constant 0 : i32
    return %c0_i32, %c0_i32_0 : i32, i32
  }
  func.func @transform_5(%arg0: i32) -> (i32, i32) {
    %c0_i32 = arith.constant 0 : i32
    %c0_i32_0 = arith.constant 0 : i32
    return %c0_i32, %arg0 : i32, i32
  }
}

</mosaic_0001>

<llo_original>
// kernel: tpu_custom_call.1
$region0: #{tpu_custom_call.1}
  #allocation0 [shape = 'u32[]', space=smem, size = 0x4, offset = 0x4, fixed_abs, tag = 'smem constant byte address 0x4 - core index']
  #allocation1 [shape = 'u32[144,128]{1,0:T(1,128)}', space=vmem, size = 0x12000, scoped, tag = 'internal scratch']
  #allocation2 [shape = 'f32[1,1]{1,0:T(1,128)S(1)}', space=vmem, size = 0x200, scoped, tag = 'scoped memory for tpu_custom_call.1']
  %s0 = inlined_call_operand.vmem [shape: f32[4,128], index: 0, kind: input, shape index: {}]
  %s1 = inlined_call_operand.vmem [shape: f32[20,4], index: 1, kind: input, shape index: {}]
  %s2 = inlined_call_operand.vmem [shape: f32[20,1], index: 2, kind: input, shape index: {}]
  %s3 = inlined_call_operand.vmem [shape: f32[20,1], index: 3, kind: input, shape index: {}]
  %s4 = inlined_call_operand.<no memory space> [shape: f32[1,1], index: 4, kind: input, shape index: {}]
  %s5 = inlined_call_operand.hbm [shape: f32[1,128], index: 5, kind: output, shape index: {}]
  %s6 = sld [smem:[#allocation0]]
  $region30: #{tpu_custom_call.1} parent=0
    _
  %s8 = ssub.s32 1, %s6
  %s9 = scalar_select 0, %s8, %s6
  %v10 = vstv %s4
  %11 = vst [vmem:[#allocation2] sm:$0x1] %v10
  $region1: #{tpu_custom_call.1} parent=0
    #allocation3 [shape = 'u8[512]{0}', space=vmem, size = 0x400, scoped, tag = 'output window, operand 0, single buffered']
    #allocation4 [shape = 's32[1]{0}', space=sflag, size = 0x4, scoped, tag = 'scoped memory for tpu_custom_call.1']
    %12 = vsyncpa [#allocation4], 0
    // Predicated region
    $region2: #{tpu_custom_call.1} parent=1 // pred_check
      _
    $region3: #{tpu_custom_call.1} parent=1 // pred_check_branch
      %14 = sbr.rel (0) target = $region5
    $region4: #{tpu_custom_call.1} parent=1 // pred_region
      _
    $region5: #{tpu_custom_call.1} parent=1 // pred_fallthru
      _
    // Predicated region
    $region6: #{tpu_custom_call.1} parent=1 // pred_check
      _
    $region7: #{tpu_custom_call.1} parent=1 // pred_check_branch
      %16 = sbr.rel (0) target = $region9
    $region8: #{tpu_custom_call.1} parent=1 // pred_region
      _
    $region9: #{tpu_custom_call.1} parent=1 // pred_fallthru
      _
    // Predicated region
    $region10: #{tpu_custom_call.1} parent=1 // pred_check
      _
    $region11: #{tpu_custom_call.1} parent=1 // pred_check_branch
      %18 = sbr.rel (0) target = $region13
    $region12: #{tpu_custom_call.1} parent=1 // pred_region
      _
    $region13: #{tpu_custom_call.1} parent=1 // pred_fallthru
      _
    // Predicated region
    $region14: #{tpu_custom_call.1} parent=1 // pred_check
      _
    $region15: #{tpu_custom_call.1} parent=1 // pred_check_branch
      %20 = sbr.rel (0) target = $region17
    $region16: #{tpu_custom_call.1} parent=1 // pred_region
      _
    $region17: #{tpu_custom_call.1} parent=1 // pred_fallthru
      _
    // Predicated region
    $region18: #{tpu_custom_call.1} parent=1 // pred_check
      _
    $region19: #{tpu_custom_call.1} parent=1 // pred_check_branch
      %22 = sbr.rel (0) target = $region21
    $region20: #{tpu_custom_call.1} parent=1 // pred_region
      _
    $region21: #{tpu_custom_call.1} parent=1 // pred_fallthru
      _
    %v23 = vld [vmem:[%s1] sm:$0xff]
    %v24 = vld [vmem:[%s1 + $0x8] sm:$0xff]
    %v25 = vld [vmem:[%s1 + $0x10] sm:$0xf]
    %v26 = vld [vmem:[%s0] sm:$0xf]
    %v27 = vld [vmem:[%s2] sm:$0xff]
    %v28 = vld [vmem:[%s2 + $0x8] sm:$0xff]
    %v29 = vld [vmem:[%s2 + $0x10] sm:$0xf]
    %31 = vset.pattern.permute.xlu0 0
    %32 = vperm.xlu0 %31, %v27
    %v33 = vpop.permute.xlu0 %32
    %36 = vset.pattern.permute.xlu0 0
    %37 = vperm.xlu0 %36, %v28
    %v38 = vpop.permute.xlu0 %37
    %41 = vset.pattern.permute.xlu0 0
    %42 = vperm.xlu0 %41, %v29
    %v43 = vpop.permute.xlu0 %42
    %vm45 = vcmask 31744
    %v47 = vsel %vm45, %v23, 0
    %v50 = vsel %vm45, %v24, 0
    %v53 = vsel %vm45, %v25, 0
    %vm55 = vcmask 1043456
    %v57 = vsel %vm55, %v26, 0
    %59 = vmatprep.subr.mxu0 0.0
    %60 = vmatpush1.msra.mxu0 %v57
    %61 = vmatprep.subr.mxu0 0.0
    %62 = vmatpush1.msra.mxu0 0.0
    %63 = vmatprep.subr.mxu0 0.0
    %64 = vmatpush1.msra.mxu0 0.0
    %65 = vmatprep.subr.mxu0 0.0
    %66 = vmatpush1.msra.mxu0 0.0
    %67 = vmatprep.subr.mxu0 0.0
    %68 = vmatpush1.msra.mxu0 0.0
    %69 = vmatprep.subr.mxu0 0.0
    %70 = vmatpush1.msra.mxu0 0.0
    %71 = vmatprep.subr.mxu0 0.0
    %72 = vmatpush1.msra.mxu0 0.0
    %73 = vmatprep.subr.mxu0 0.0
    %74 = vmatpush1.msra.mxu0 0.0
    %75 = vmatprep.subr.mxu0 0.0
    %76 = vmatpush1.msra.mxu0 0.0
    %77 = vmatprep.subr.mxu0 0.0
    %78 = vmatpush1.msra.mxu0 0.0
    %79 = vmatprep.subr.mxu0 0.0
    %80 = vmatpush1.msra.mxu0 0.0
    %81 = vmatprep.subr.mxu0 0.0
    %82 = vmatpush1.msra.mxu0 0.0
    %83 = vmatprep.subr.mxu0 0.0
    %84 = vmatpush1.msra.mxu0 0.0
    %85 = vmatprep.subr.mxu0 0.0
    %86 = vmatpush1.msra.mxu0 0.0
    %87 = vmatprep.subr.mxu0 0.0
    %88 = vmatpush1.msra.mxu0 0.0
    %89 = vmatprep.subr.mxu0 0.0
    %90 = vmatpush1.msra.mxu0 0.0
    %91 = vmatprep.subr.mxu0 0.0
    %92 = vmatpush1.msra.mxu0 0.0
    %93 = vmatprep.subr.mxu0 0.0
    %94 = vmatpush1.msra.mxu0 0.0
    %95 = vmatprep.subr.mxu0 0.0
    %96 = vmatpush1.msra.mxu0 0.0
    %97 = vmatprep.subr.mxu0 0.0
    %98 = vmatpush1.msra.mxu0 0.0
    %99 = vmatprep.subr.mxu0 0.0
    %100 = vmatpush1.msra.mxu0 0.0
    %101 = vmatprep.subr.mxu0 0.0
    %102 = vmatpush1.msra.mxu0 0.0
    %103 = vmatprep.subr.mxu0 0.0
    %104 = vmatpush1.msra.mxu0 0.0
    %105 = vmatprep.subr.mxu0 0.0
    %106 = vmatpush1.msra.mxu0 0.0
    %107 = vmatprep.subr.mxu0 0.0
    %108 = vmatpush1.msra.mxu0 0.0
    %109 = vmatprep.subr.mxu0 0.0
    %110 = vmatpush1.msra.mxu0 0.0
    %111 = vmatprep.subr.mxu0 0.0
    %112 = vmatpush1.msra.mxu0 0.0
    %113 = vmatprep.subr.mxu0 0.0
    %114 = vmatpush1.msra.mxu0 0.0
    %115 = vmatprep.subr.mxu0 0.0
    %116 = vmatpush1.msra.mxu0 0.0
    %117 = vmatprep.subr.mxu0 0.0
    %118 = vmatpush1.msra.mxu0 0.0
    %119 = vmatprep.subr.mxu0 0.0
    %120 = vmatpush1.msra.mxu0 0.0
    %121 = vmatprep.subr.mxu0 0.0
    %122 = vmatpush1.msra.mxu0 0.0
    %123 = vmatprep.mubr.f32.mxu0 0.0
    %124 = vmatmul.mubr.f32.gmra.mrb[0].mxu0 %v47
    %v125 = vpop.f32.mrb[0].mxu0
    %v126 = vadd.f32 %v33, %v125
    %v127 = vpop.f32.mrb[0].mxu0
    %128 = vmatprep.mubr.f32.mxu0 0.0
    %129 = vmatmul.mubr.f32.gmra.mrb[0].mxu0 %v50
    %v130 = vpop.f32.mrb[0].mxu0
    %v131 = vadd.f32 %v38, %v130
    %v132 = vpop.f32.mrb[0].mxu0
    %133 = vmatprep.mubr.f32.mxu0 0.0
    %134 = vmatmul.mubr.f32.gmra.mrb[0].mxu0 %v53
    %v135 = vpop.f32.mrb[0].mxu0
    %v136 = vadd.f32 %v43, %v135
    %v137 = vpop.f32.mrb[0].mxu0
    %138 = vdwg.mxu0
    %v139 = vmax.f32 %v126, 0.0
    %v140 = vmax.f32 %v131, 0.0
    %v141 = vmax.f32 %v136, 0.0
    %v142 = vld [vmem:[%s3] sm:$0xff]
    %v143 = vld [vmem:[%s3 + $0x8] sm:$0xff]
    %v144 = vld [vmem:[%s3 + $0x10] sm:$0xf]
    %146 = vset.pattern.permute.xlu0 0
    %147 = vperm.xlu0 %146, %v142
    %v148 = vpop.permute.xlu0 %147
    %151 = vset.pattern.permute.xlu0 0
    %152 = vperm.xlu0 %151, %v143
    %v153 = vpop.permute.xlu0 %152
    %156 = vset.pattern.permute.xlu0 0
    %157 = vperm.xlu0 %156, %v144
    %v158 = vpop.permute.xlu0 %157
    %v160 = vmul.f32 %v139, %v148
    %v161 = vmul.f32 %v140, %v153
    %v162 = vmul.f32 %v141, %v158
    %v163 = vadd.f32 %v160, %v161
    %v164 = vsel %vm55, %v162, 0.0
    %v165 = vadd.f32 %v163, %v164
    %v166 = vrot.slane %v165, 4
    %v167 = vadd.f32 %v165, %v166
    %v168 = vrot.slane %v167, 2
    %v169 = vadd.f32 %v167, %v168
    %v170 = vrot.slane %v169, 1
    %v171 = vadd.f32 %v169, %v170
    %v172 = vld [vmem:[#allocation2] sm:$0x1]
    %174 = vset.pattern.permute.xlu0 0
    %175 = vperm.xlu0 %174, %v172
    %v176 = vpop.permute.xlu0 %175
    %v178 = vlaneseq
    %v179 = vshrl.u32 %v178, 7
    %v180 = vsub.s32 0, %v179
    %v181 = vrot.slane %v176, %v180
    %v182 = vadd.f32 %v171, %v181
    %183 = vst [vmem:[#allocation3] sm:$0x1] %v182
    // Predicated region
    $region22: #{tpu_custom_call.1} parent=1 // pred_check
      _
    $region23: #{tpu_custom_call.1} parent=1 // pred_check_branch
      %185 = sbr.rel (0) target = $region25
    $region24: #{tpu_custom_call.1} parent=1 // pred_region
      %s187 = ssub.s32 16, 16
      %188 = vsyncadd [#allocation4], %s187
      %s190 = sshll.u32 [#allocation3], 4
      %s191 = int_to_ptr.vmem [resolvable:$true] %s190
      %193 = dma.vmem_to_hbm [thread:$0]  %s191, 16, %s5, [#allocation4]
    $region25: #{tpu_custom_call.1} parent=1 // pred_fallthru
      _
    // Predicated region
    $region26: #{tpu_custom_call.1} parent=1 // pred_check
      _
    $region27: #{tpu_custom_call.1} parent=1 // pred_check_branch
      %195 = sbr.rel (0) target = $region29
    $region28: #{tpu_custom_call.1} parent=1 // pred_region
      %196 = dma.done [#allocation4], 16
    $region29: #{tpu_custom_call.1} parent=1 // pred_fallthru
      _
    %197 = vsyncpa [#allocation4], 1

</llo_original>
